<compile_context>
chip_gen: v7x
topology: tpu7x:2x2x1
jax: 0.10.0
libtpu: 0.0.40
codegen_flags: <defaults>
</compile_context>

<pallas_src>
import jax
import jax.numpy as jnp
from jax.experimental import pallas as pl
from jax.experimental.pallas import tpu as pltpu


def _round_up(n, m):
    return ((n + m - 1) // m) * m


def _make_kernel(w_hidden):
    W = w_hidden          # hidden width (256)
    H = W // 2            # dir_encoding width (128)

    def kernel(x_ref, w0_ref, wfd_ref, wr_ref, bias_ref, o_ref):
        f32 = jnp.float32
        bf16 = jnp.bfloat16

        # xyz_encoding_1: Linear(C -> W) + Swish   (bf16 MXU operands, f32 accumulation)
        x = x_ref[...].astype(bf16)
        b0 = bias_ref[:, 0:W]
        h = jnp.dot(x, w0_ref[...], preferred_element_type=f32) + b0
        h = h * jax.nn.sigmoid(h)

        # xyz_encoding_final folded into dir_encoding (no nonlinearity between them):
        #   d = Swish(h @ (Wf @ Wd) + (bf @ Wd + bd))
        bfd = bias_ref[:, W:W + H]
        d = jnp.dot(h.astype(bf16), wfd_ref[...], preferred_element_type=f32) + bfd
        d = d * jax.nn.sigmoid(d)

        # rgb head: Linear(H -> 7); raw_feat=True so the sigma head is never computed.
        br = bias_ref[:, W + H:W + H + 7]
        raw = jnp.dot(d.astype(bf16), wr_ref[...], preferred_element_type=f32) + br

        # rts post-processing
        tmat = raw[:, 0:3] * 0.1                      # scale_t = 0.1
        quat = raw[:, 3:7]                            # (w, x, y, z)
        # F.normalize followed by pytorch3d's two_s = 2/sum(qn^2) is algebraically
        # identical to using two_s = 2/||q||^2 on the raw quaternion directly.
        sq = jnp.sum(quat * quat, axis=-1, keepdims=True)
        two_s = 2.0 * pl.reciprocal(jnp.maximum(sq, 1e-24), approx=True)
        r = quat[:, 0:1]
        i = quat[:, 1:2]
        j = quat[:, 2:3]
        k = quat[:, 3:4]
        rot = jnp.concatenate([
            1.0 - two_s * (j * j + k * k),
            two_s * (i * j - k * r),
            two_s * (i * k + j * r),
            two_s * (i * j + k * r),
            1.0 - two_s * (i * i + k * k),
            two_s * (j * k - i * r),
            two_s * (i * k - j * r),
            two_s * (j * k + i * r),
            1.0 - two_s * (i * i + j * j),
        ], axis=-1)                                   # [TB, 9] row-major rmat
        o_ref[...] = jnp.concatenate([rot, tmat], axis=-1)   # [TB, 12]

    return kernel


@jax.jit
def banmo_rotation_decoder(x, kparams):
    """x: [B, n_channels] f32 codes -> [B, 12] (9 rotation entries + 3 translation)."""
    B, C = x.shape
    W = kparams["w0"].shape[1]
    H = W // 2
    bias = kparams["bias"]

    # Row tile: multiple of the f32 sublane (8); cap so the working set stays tiny on
    # every generation (v5e/v6e/v7x — VMEM is never a constraint for this kernel).
    TB = min(_round_up(B, 8), 512)
    Bp = _round_up(B, TB)
    if Bp != B:
        x = jnp.pad(x, ((0, Bp - B), (0, 0)))

    out = pl.pallas_call(
        _make_kernel(W),
        out_shape=jax.ShapeDtypeStruct((Bp, 12), jnp.float32),
        grid=(Bp // TB,),
        in_specs=[
            pl.BlockSpec((TB, C), lambda i: (i, 0)),            # x: tiled over rows
            pl.BlockSpec((C, W), lambda i: (0, 0)),             # w0: VMEM-resident
            pl.BlockSpec((W, H), lambda i: (0, 0)),             # wfd (folded): VMEM-resident
            pl.BlockSpec((H, 7), lambda i: (0, 0)),             # wr: VMEM-resident
            pl.BlockSpec((1, bias.shape[1]), lambda i: (0, 0)), # packed biases
        ],
        out_specs=pl.BlockSpec((TB, 12), lambda i: (i, 0)),
        compiler_params=pltpu.CompilerParams(
            dimension_semantics=("parallel",)),                 # 2x on v7x (2 TCs), no-op elsewhere
    )(x, kparams["w0"], kparams["wfd"], kparams["wr"], bias)

    return out[:B] if Bp != B else out


def init_params(key, n_channels, hidden):
    """Deterministic synthetic parameters.
    # TODO(synk): pretrained PoseNet checkpoint loading (torch.load) is not reproducible here.
    Returns:
      module_params: per-layer weights/biases (bf16-valued, stored f32) for the
                     pure-JAX PyTorch-semantics reference.
      kernel_params: folded / packed bf16 operands consumed by the Pallas kernel.
    """
    ks = jax.random.split(key, 8)

    def linear(kw, kb, fan_in, fan_out):
        bound = 1.0 / jnp.sqrt(jnp.float32(fan_in))
        w = jax.random.uniform(kw, (fan_in, fan_out), jnp.float32, -bound, bound)
        w = w.astype(jnp.bfloat16).astype(jnp.float32)   # weights live in bf16 (DMA-halving)
        b = 0.01 * jax.random.normal(kb, (1, fan_out), dtype=jnp.float32)
        return w, b

    w0, b0 = linear(ks[0], ks[1], n_channels, hidden)        # xyz_encoding_1
    wf, bf = linear(ks[2], ks[3], hidden, hidden)            # xyz_encoding_final
    wd, bd = linear(ks[4], ks[5], hidden, hidden // 2)       # dir_encoding
    wr, br = linear(ks[6], ks[7], hidden // 2, 7)            # rgb head (tmat + quat)
    # Identity-quaternion prior on the w component: keeps the synthetic quaternion
    # well away from zero norm (as a real pretrained head would), so the
    # normalization is well-conditioned in the self-test.
    br = br.at[0, 3].add(1.0)

    module_params = dict(w0=w0, b0=b0, wf=wf, bf=bf, wd=wd, bd=bd, wr=wr, br=br)

    # Fold the activation-free xyz_encoding_final into dir_encoding (f32 fold, bf16 store).
    wfd = (wf @ wd).astype(jnp.bfloat16)
    bfd = bf @ wd + bd                                        # [1, hidden//2] f32

    # Pack all biases into one lane-padded f32 operand: [ b0 | bfd | br | zero-pad ].
    H = hidden // 2
    bias_len = _round_up(hidden + H + 7, 128)
    bias = jnp.zeros((1, bias_len), jnp.float32)
    bias = bias.at[:, 0:hidden].set(b0)
    bias = bias.at[:, hidden:hidden + H].set(bfd)
    bias = bias.at[:, hidden + H:hidden + H + 7].set(br)

    kernel_params = dict(
        w0=w0.astype(jnp.bfloat16),
        wfd=wfd,
        wr=wr.astype(jnp.bfloat16),
        bias=bias,
    )
    return module_params, kernel_params


def reference_forward(x, p):
    """Pure-JAX reference with the PyTorch module's (f32, unfused) forward semantics."""
    hp = jax.lax.Precision.HIGHEST

    h = jnp.dot(x, p["w0"], precision=hp) + p["b0"]           # xyz_encoding_1
    h = h * jax.nn.sigmoid(h)
    hf = jnp.dot(h, p["wf"], precision=hp) + p["bf"]          # xyz_encoding_final
    d = jnp.dot(hf, p["wd"], precision=hp) + p["bd"]          # dir_encoding (in_channels_dir=0)
    d = d * jax.nn.sigmoid(d)
    raw = jnp.dot(d, p["wr"], precision=hp) + p["br"]         # rgb head, raw_feat=True

    tmat = raw[:, 0:3] * 0.1
    quat = raw[:, 3:7]
    norm = jnp.sqrt(jnp.sum(quat * quat, axis=-1, keepdims=True))
    qn = quat / jnp.maximum(norm, 1e-12)                      # F.normalize(p=2, eps=1e-12)
    two_s = 2.0 / jnp.sum(qn * qn, axis=-1)                   # pytorch3d quaternion_to_matrix
    r, i, j, k = qn[:, 0], qn[:, 1], qn[:, 2], qn[:, 3]
    rot = jnp.stack([
        1.0 - two_s * (j * j + k * k), two_s * (i * j - k * r), two_s * (i * k + j * r),
        two_s * (i * j + k * r), 1.0 - two_s * (i * i + k * k), two_s * (j * k - i * r),
        two_s * (i * k - j * r), two_s * (j * k + i * r), 1.0 - two_s * (i * i + j * j),
    ], axis=-1)
    return jnp.concatenate([rot, tmat], axis=-1)


if __name__ == "__main__":
    n_channels = 128                  # module default
    hidden = 2 * n_channels           # 256
    batch = 8                         # small example batch (callers flatten leading dims)

    key = jax.random.PRNGKey(0)
    kx, kp = jax.random.split(key)
    x = jax.random.normal(kx, (batch, n_channels), dtype=jnp.float32)
    module_params, kernel_params = init_params(kp, n_channels, hidden)

    out = jax.block_until_ready(banmo_rotation_decoder(x, kernel_params))
    ref = reference_forward(x, module_params)

    assert out.shape == (batch, 12)
    max_err = float(jnp.max(jnp.abs(out - ref)))
    # bf16 activations/folded-weights vs f32 reference: tolerance per perf-review guidance.
    if not jnp.allclose(out, ref, atol=5e-3, rtol=5e-3):
        raise AssertionError(f"kernel/reference mismatch, max abs err {max_err}")
    print("KERNEL_OK")
</pallas_src>

<mosaic_0001>
module attributes {stable_mosaic.version = 11 : i64} {
  func.func @kernel(%arg0: i32, %arg1: memref<8x128xf32, #tpu.memory_space<vmem>>, %arg2: memref<128x256xbf16, #tpu.memory_space<vmem>>, %arg3: memref<256x128xbf16, #tpu.memory_space<vmem>>, %arg4: memref<128x7xbf16, #tpu.memory_space<vmem>>, %arg5: memref<1x512xf32, #tpu.memory_space<vmem>>, %arg6: memref<8x12xf32, #tpu.memory_space<vmem>>) attributes {dimension_semantics = [#tpu.dimension_semantics<parallel>], iteration_bounds = array<i64: 1>, scalar_prefetch = 0 : i64, scratch_operands = 0 : i64, tpu.core_type = #tpu.core_type<tc>, window_params = [{transform_indices = @transform_0, window_bounds = array<i64: 8, 128>}, {pipeline_mode = #tpu.pipeline_mode<synchronous>, transform_indices = @transform_1, window_bounds = array<i64: 128, 256>}, {pipeline_mode = #tpu.pipeline_mode<synchronous>, transform_indices = @transform_2, window_bounds = array<i64: 256, 128>}, {pipeline_mode = #tpu.pipeline_mode<synchronous>, transform_indices = @transform_3, window_bounds = array<i64: 128, 7>}, {pipeline_mode = #tpu.pipeline_mode<synchronous>, transform_indices = @transform_4, window_bounds = array<i64: 1, 512>}, {transform_indices = @transform_5, window_bounds = array<i64: 8, 12>}]} {
    %c0 = arith.constant 0 : index
    %c0_0 = arith.constant 0 : index
    %0 = vector.load %arg1[%c0, %c0_0] : memref<8x128xf32, #tpu.memory_space<vmem>>, vector<8x128xf32>
    %1 = arith.truncf %0 : vector<8x128xf32> to vector<8x128xbf16>
    %c0_1 = arith.constant 0 : index
    %c0_2 = arith.constant 0 : index
    %2 = vector.load %arg5[%c0_1, %c0_2] : memref<1x512xf32, #tpu.memory_space<vmem>>, vector<1x256xf32>
    %c0_3 = arith.constant 0 : index
    %c0_4 = arith.constant 0 : index
    %3 = vector.load %arg2[%c0_3, %c0_4] : memref<128x256xbf16, #tpu.memory_space<vmem>>, vector<128x256xbf16>
    %cst = arith.constant dense<0.000000e+00> : vector<8x256xf32>
    %4 = tpu.matmul %1, %3, %cst {dimension_numbers = #tpu.dot_dimension_numbers<[1], [0], [0], [1], [0, 0, 1, 1], [], []>} : vector<8x128xbf16>, vector<128x256xbf16>, vector<8x256xf32> -> vector<8x256xf32>
    %5 = vector.broadcast %2 : vector<1x256xf32> to vector<8x256xf32>
    %6 = arith.addf %4, %5 : vector<8x256xf32>
    %7 = arith.negf %6 : vector<8x256xf32>
    %8 = math.exp %7 : vector<8x256xf32>
    %cst_5 = arith.constant 1.000000e+00 : f32
    %9 = vector.broadcast %cst_5 : f32 to vector<8x256xf32>
    %10 = arith.addf %9, %8 : vector<8x256xf32>
    %11 = arith.divf %9, %10 : vector<8x256xf32>
    %12 = arith.mulf %6, %11 : vector<8x256xf32>
    %c0_6 = arith.constant 0 : index
    %c256 = arith.constant 256 : index
    %13 = vector.load %arg5[%c0_6, %c256] : memref<1x512xf32, #tpu.memory_space<vmem>>, vector<1x128xf32>
    %14 = arith.truncf %12 : vector<8x256xf32> to vector<8x256xbf16>
    %c0_7 = arith.constant 0 : index
    %c0_8 = arith.constant 0 : index
    %15 = vector.load %arg3[%c0_7, %c0_8] : memref<256x128xbf16, #tpu.memory_space<vmem>>, vector<256x128xbf16>
    %cst_9 = arith.constant dense<0.000000e+00> : vector<8x128xf32>
    %16 = tpu.matmul %14, %15, %cst_9 {dimension_numbers = #tpu.dot_dimension_numbers<[1], [0], [0], [1], [0, 0, 1, 1], [], []>} : vector<8x256xbf16>, vector<256x128xbf16>, vector<8x128xf32> -> vector<8x128xf32>
    %17 = vector.broadcast %13 : vector<1x128xf32> to vector<8x128xf32>
    %18 = arith.addf %16, %17 : vector<8x128xf32>
    %19 = arith.negf %18 : vector<8x128xf32>
    %20 = math.exp %19 : vector<8x128xf32>
    %cst_10 = arith.constant 1.000000e+00 : f32
    %21 = vector.broadcast %cst_10 : f32 to vector<8x128xf32>
    %22 = arith.addf %21, %20 : vector<8x128xf32>
    %23 = arith.divf %21, %22 : vector<8x128xf32>
    %24 = arith.mulf %18, %23 : vector<8x128xf32>
    %c0_11 = arith.constant 0 : index
    %c384 = arith.constant 384 : index
    %25 = vector.load %arg5[%c0_11, %c384] : memref<1x512xf32, #tpu.memory_space<vmem>>, vector<1x7xf32>
    %26 = arith.truncf %24 : vector<8x128xf32> to vector<8x128xbf16>
    %c0_12 = arith.constant 0 : index
    %c0_13 = arith.constant 0 : index
    %27 = vector.load %arg4[%c0_12, %c0_13] : memref<128x7xbf16, #tpu.memory_space<vmem>>, vector<128x7xbf16>
    %cst_14 = arith.constant dense<0.000000e+00> : vector<8x7xf32>
    %28 = tpu.matmul %26, %27, %cst_14 {dimension_numbers = #tpu.dot_dimension_numbers<[1], [0], [0], [1], [0, 0, 1, 1], [], []>} : vector<8x128xbf16>, vector<128x7xbf16>, vector<8x7xf32> -> vector<8x7xf32>
    %29 = vector.broadcast %25 : vector<1x7xf32> to vector<8x7xf32>
    %30 = arith.addf %28, %29 : vector<8x7xf32>
    %31 = vector.extract_strided_slice %30 {offsets = [0, 0], sizes = [8, 3], strides = [1, 1]} : vector<8x7xf32> to vector<8x3xf32>
    %cst_15 = arith.constant 1.000000e-01 : f32
    %32 = vector.broadcast %cst_15 : f32 to vector<8x3xf32>
    %33 = arith.mulf %31, %32 : vector<8x3xf32>
    %34 = vector.extract_strided_slice %30 {offsets = [0, 3], sizes = [8, 4], strides = [1, 1]} : vector<8x7xf32> to vector<8x4xf32>
    %35 = arith.mulf %34, %34 : vector<8x4xf32>
    %cst_16 = arith.constant dense<0.000000e+00> : vector<8xf32>
    %36 = vector.multi_reduction <add>, %35, %cst_16 [1] : vector<8x4xf32> to vector<8xf32>
    %37 = vector.shape_cast %36 : vector<8xf32> to vector<8x1xf32>
    %cst_17 = arith.constant 1.000000e-24 : f32
    %38 = vector.broadcast %cst_17 : f32 to vector<8x1xf32>
    %39 = arith.maximumf %37, %38 : vector<8x1xf32>
    %40 = tpu.reciprocal %39 {approx = true} : vector<8x1xf32> -> vector<8x1xf32>
    %cst_18 = arith.constant 2.000000e+00 : f32
    %41 = vector.broadcast %cst_18 : f32 to vector<8x1xf32>
    %42 = arith.mulf %41, %40 : vector<8x1xf32>
    %43 = vector.extract_strided_slice %34 {offsets = [0, 0], sizes = [8, 1], strides = [1, 1]} : vector<8x4xf32> to vector<8x1xf32>
    %44 = vector.extract_strided_slice %34 {offsets = [0, 1], sizes = [8, 1], strides = [1, 1]} : vector<8x4xf32> to vector<8x1xf32>
    %45 = vector.extract_strided_slice %34 {offsets = [0, 2], sizes = [8, 1], strides = [1, 1]} : vector<8x4xf32> to vector<8x1xf32>
    %46 = vector.extract_strided_slice %34 {offsets = [0, 3], sizes = [8, 1], strides = [1, 1]} : vector<8x4xf32> to vector<8x1xf32>
    %47 = arith.mulf %45, %45 : vector<8x1xf32>
    %48 = arith.mulf %46, %46 : vector<8x1xf32>
    %49 = arith.addf %47, %48 : vector<8x1xf32>
    %50 = arith.mulf %42, %49 : vector<8x1xf32>
    %cst_19 = arith.constant 1.000000e+00 : f32
    %51 = vector.broadcast %cst_19 : f32 to vector<8x1xf32>
    %52 = arith.subf %51, %50 : vector<8x1xf32>
    %53 = arith.mulf %44, %45 : vector<8x1xf32>
    %54 = arith.mulf %46, %43 : vector<8x1xf32>
    %55 = arith.subf %53, %54 : vector<8x1xf32>
    %56 = arith.mulf %42, %55 : vector<8x1xf32>
    %57 = arith.mulf %44, %46 : vector<8x1xf32>
    %58 = arith.mulf %45, %43 : vector<8x1xf32>
    %59 = arith.addf %57, %58 : vector<8x1xf32>
    %60 = arith.mulf %42, %59 : vector<8x1xf32>
    %61 = arith.mulf %44, %45 : vector<8x1xf32>
    %62 = arith.mulf %46, %43 : vector<8x1xf32>
    %63 = arith.addf %61, %62 : vector<8x1xf32>
    %64 = arith.mulf %42, %63 : vector<8x1xf32>
    %65 = arith.mulf %44, %44 : vector<8x1xf32>
    %66 = arith.mulf %46, %46 : vector<8x1xf32>
    %67 = arith.addf %65, %66 : vector<8x1xf32>
    %68 = arith.mulf %42, %67 : vector<8x1xf32>
    %cst_20 = arith.constant 1.000000e+00 : f32
    %69 = vector.broadcast %cst_20 : f32 to vector<8x1xf32>
    %70 = arith.subf %69, %68 : vector<8x1xf32>
    %71 = arith.mulf %45, %46 : vector<8x1xf32>
    %72 = arith.mulf %44, %43 : vector<8x1xf32>
    %73 = arith.subf %71, %72 : vector<8x1xf32>
    %74 = arith.mulf %42, %73 : vector<8x1xf32>
    %75 = arith.mulf %44, %46 : vector<8x1xf32>
    %76 = arith.mulf %45, %43 : vector<8x1xf32>
    %77 = arith.subf %75, %76 : vector<8x1xf32>
    %78 = arith.mulf %42, %77 : vector<8x1xf32>
    %79 = arith.mulf %45, %46 : vector<8x1xf32>
    %80 = arith.mulf %44, %43 : vector<8x1xf32>
    %81 = arith.addf %79, %80 : vector<8x1xf32>
    %82 = arith.mulf %42, %81 : vector<8x1xf32>
    %83 = arith.mulf %44, %44 : vector<8x1xf32>
    %84 = arith.mulf %45, %45 : vector<8x1xf32>
    %85 = arith.addf %83, %84 : vector<8x1xf32>
    %86 = arith.mulf %42, %85 : vector<8x1xf32>
    %cst_21 = arith.constant 1.000000e+00 : f32
    %87 = vector.broadcast %cst_21 : f32 to vector<8x1xf32>
    %88 = arith.subf %87, %86 : vector<8x1xf32>
    %89 = tpu.concatenate %52, %56, %60, %64, %70, %74, %78, %82, %88 in 1 : vector<8x1xf32>, vector<8x1xf32>, vector<8x1xf32>, vector<8x1xf32>, vector<8x1xf32>, vector<8x1xf32>, vector<8x1xf32>, vector<8x1xf32>, vector<8x1xf32> -> vector<8x9xf32>
    %90 = tpu.concatenate %89, %33 in 1 : vector<8x9xf32>, vector<8x3xf32> -> vector<8x12xf32>
    %c0_22 = arith.constant 0 : index
    %c0_23 = arith.constant 0 : index
    %91 = vector.load %arg6[%c0_22, %c0_23] : memref<8x12xf32, #tpu.memory_space<vmem>>, vector<8x12xf32>
    tpu.vector_store %arg6[%c0_22, %c0_23], %90 {strides = array<i32>} : memref<8x12xf32, #tpu.memory_space<vmem>>, vector<8x12xf32>,
    return
  }
  func.func @transform_0(%arg0: i32) -> (i32, i32) {
    %c0_i32 = arith.constant 0 : i32
    %c0_i32_0 = arith.constant 0 : i32
    return %arg0, %c0_i32 : i32, i32
  }
  func.func @transform_1(%arg0: i32) -> (i32, i32) {
    %c0_i32 = arith.constant 0 : i32
    %c0_i32_0 = arith.constant 0 : i32
    %c0_i32_1 = arith.constant 0 : i32
    return %c0_i32, %c0_i32_0 : i32, i32
  }
  func.func @transform_2(%arg0: i32) -> (i32, i32) {
    %c0_i32 = arith.constant 0 : i32
    %c0_i32_0 = arith.constant 0 : i32
    %c0_i32_1 = arith.constant 0 : i32
    return %c0_i32, %c0_i32_0 : i32, i32
  }
  func.func @transform_3(%arg0: i32) -> (i32, i32) {
    %c0_i32 = arith.constant 0 : i32
    %c0_i32_0 = arith.constant 0 : i32
    %c0_i32_1 = arith.constant 0 : i32
    return %c0_i32, %c0_i32_0 : i32, i32
  }
  func.func @transform_4(%arg0: i32) -> (i32, i32) {
    %c0_i32 = arith.constant 0 : i32
    %c0_i32_0 = arith.constant 0 : i32
    %c0_i32_1 = arith.constant 0 : i32
    return %c0_i32, %c0_i32_0 : i32, i32
  }
  func.func @transform_5(%arg0: i32) -> (i32, i32) {
    %c0_i32 = arith.constant 0 : i32
    %c0_i32_0 = arith.constant 0 : i32
    return %arg0, %c0_i32 : i32, i32
  }
}

</mosaic_0001>

<llo_original>
// kernel: banmo_rotation_decoder.1
$region0: #{banmo_rotation_decoder.1}
  #allocation0 [shape = 'u32[]', space=smem, size = 0x4, offset = 0x4, fixed_abs, tag = 'smem constant byte address 0x4 - core index']
  #allocation1 [shape = 'u32[144,128]{1,0:T(1,128)}', space=vmem, size = 0x12000, scoped, tag = 'internal scratch']
  %s0 = inlined_call_operand.vmem [shape: f32[8,128], index: 0, kind: input, shape index: {}]
  %s1 = inlined_call_operand.hbm [shape: bf16[128,256], index: 1, kind: input, shape index: {}]
  %s2 = inlined_call_operand.hbm [shape: bf16[256,128], index: 2, kind: input, shape index: {}]
  %s3 = inlined_call_operand.vmem [shape: bf16[128,7], index: 3, kind: input, shape index: {}]
  %s4 = inlined_call_operand.vmem [shape: f32[1,512], index: 4, kind: input, shape index: {}]
  %s5 = inlined_call_operand.hbm [shape: f32[8,12], index: 5, kind: output, shape index: {}]
  %s6 = sld [smem:[#allocation0]]
  $region38: #{banmo_rotation_decoder.1} parent=0
    _
  %s8 = ssub.s32 1, %s6
  %s9 = scalar_select 0, %s8, %s6
  $region1: #{banmo_rotation_decoder.1} parent=0
    #allocation2 [shape = 'u8[65536]{0}', space=vmem, size = 0x10000, scoped, tag = 'input window, operand 1, single buffered']
    #allocation3 [shape = 's32[1]{0}', space=sflag, size = 0x4, scoped, tag = 'scoped memory for banmo_rotation_decoder.1']
    #allocation4 [shape = 's32[1]{0}', space=sflag, size = 0x4, scoped, tag = 'scoped memory for banmo_rotation_decoder.1']
    #allocation5 [shape = 'u8[65536]{0}', space=vmem, size = 0x10000, scoped, tag = 'input window, operand 2, single buffered']
    #allocation6 [shape = 's32[1]{0}', space=sflag, size = 0x4, scoped, tag = 'scoped memory for banmo_rotation_decoder.1']
    #allocation7 [shape = 'u8[4096]{0}', space=vmem, size = 0x1000, scoped, tag = 'output window, operand 0, single buffered']
    %10 = vsyncpa [#allocation3], 0
    %11 = vsyncpa [#allocation6], 0
    %12 = vsyncpa [#allocation4], 0
    // Predicated region
    $region2: #{banmo_rotation_decoder.1} parent=1 // pred_check
      _
    $region3: #{banmo_rotation_decoder.1} parent=1 // pred_check_branch
      %14 = sbr.rel (0) target = $region5
    $region4: #{banmo_rotation_decoder.1} parent=1 // pred_region
      _
    $region5: #{banmo_rotation_decoder.1} parent=1 // pred_fallthru
      _
    // Predicated region
    $region6: #{banmo_rotation_decoder.1} parent=1 // pred_check
      _
    $region7: #{banmo_rotation_decoder.1} parent=1 // pred_check_branch
      %16 = sbr.rel (0) target = $region9
    $region8: #{banmo_rotation_decoder.1} parent=1 // pred_region
      %s18 = ssub.s32 2048, 2048
      %19 = vsyncadd [#allocation3], %s18
      %s20 = sshll.u32 [#allocation2], 4
      %s21 = int_to_ptr.vmem [resolvable:$true] %s20
      %26 = dma.hbm_to_vmem [thread:$0]  %s1, 2048, %s21, [#allocation3], 128, 128, 8
    $region9: #{banmo_rotation_decoder.1} parent=1 // pred_fallthru
      _
    // Predicated region
    $region10: #{banmo_rotation_decoder.1} parent=1 // pred_check
      _
    $region11: #{banmo_rotation_decoder.1} parent=1 // pred_check_branch
      %28 = sbr.rel (0) target = $region13
    $region12: #{banmo_rotation_decoder.1} parent=1 // pred_region
      %s30 = ssub.s32 2048, 2048
      %31 = vsyncadd [#allocation6], %s30
      %s32 = sshll.u32 [#allocation5], 4
      %s33 = int_to_ptr.vmem [resolvable:$true] %s32
      %38 = dma.hbm_to_vmem [thread:$0]  %s2, 2048, %s33, [#allocation6], 64, 64, 4
    $region13: #{banmo_rotation_decoder.1} parent=1 // pred_fallthru
      _
    // Predicated region
    $region14: #{banmo_rotation_decoder.1} parent=1 // pred_check
      _
    $region15: #{banmo_rotation_decoder.1} parent=1 // pred_check_branch
      %40 = sbr.rel (0) target = $region17
    $region16: #{banmo_rotation_decoder.1} parent=1 // pred_region
      _
    $region17: #{banmo_rotation_decoder.1} parent=1 // pred_fallthru
      _
    // Predicated region
    $region18: #{banmo_rotation_decoder.1} parent=1 // pred_check
      _
    $region19: #{banmo_rotation_decoder.1} parent=1 // pred_check_branch
      %42 = sbr.rel (0) target = $region21
    $region20: #{banmo_rotation_decoder.1} parent=1 // pred_region
      _
    $region21: #{banmo_rotation_decoder.1} parent=1 // pred_fallthru
      _
    // Predicated region
    $region22: #{banmo_rotation_decoder.1} parent=1 // pred_check
      _
    $region23: #{banmo_rotation_decoder.1} parent=1 // pred_check_branch
      %44 = sbr.rel (0) target = $region25
    $region24: #{banmo_rotation_decoder.1} parent=1 // pred_region
      %45 = dma.done [#allocation3], 2048
    $region25: #{banmo_rotation_decoder.1} parent=1 // pred_fallthru
      _
    // Predicated region
    $region26: #{banmo_rotation_decoder.1} parent=1 // pred_check
      _
    $region27: #{banmo_rotation_decoder.1} parent=1 // pred_check_branch
      %47 = sbr.rel (0) target = $region29
    $region28: #{banmo_rotation_decoder.1} parent=1 // pred_region
      %48 = dma.done [#allocation6], 2048
    $region29: #{banmo_rotation_decoder.1} parent=1 // pred_fallthru
      _
    %v50 = vld [vmem:[%s0] sm:$0xff]
    %v51 = vpack.c.bf16 %v50, %v50
    %v52 = vld [vmem:[%s4] sm:$0x3]
    %v53 = vld [vmem:[#allocation2] sm:$0xff]
    %v54 = vld [vmem:[#allocation2 + $0x8] sm:$0xff]
    %v55 = vld [vmem:[#allocation2 + $0x10] sm:$0xff]
    %v56 = vld [vmem:[#allocation2 + $0x18] sm:$0xff]
    %v57 = vld [vmem:[#allocation2 + $0x20] sm:$0xff]
    %v58 = vld [vmem:[#allocation2 + $0x28] sm:$0xff]
    %v59 = vld [vmem:[#allocation2 + $0x30] sm:$0xff]
    %v60 = vld [vmem:[#allocation2 + $0x38] sm:$0xff]
    %v61 = vld [vmem:[#allocation2 + $0x40] sm:$0xff]
    %v62 = vld [vmem:[#allocation2 + $0x48] sm:$0xff]
    %v63 = vld [vmem:[#allocation2 + $0x50] sm:$0xff]
    %v64 = vld [vmem:[#allocation2 + $0x58] sm:$0xff]
    %v65 = vld [vmem:[#allocation2 + $0x60] sm:$0xff]
    %v66 = vld [vmem:[#allocation2 + $0x68] sm:$0xff]
    %v67 = vld [vmem:[#allocation2 + $0x70] sm:$0xff]
    %v68 = vld [vmem:[#allocation2 + $0x78] sm:$0xff]
    %v70 = vlaneseq
    %v71 = vshrl.u32 %v70, 7
    %v72 = vsub.s32 0, %v71
    %v73 = vrot.slane %v52, %v72
    %v74 = vlaneseq
    %v75 = vshrl.u32 %v74, 7
    %v76 = vsub.s32 1, %v75
    %v77 = vrot.slane %v52, %v76
    %v96 = vunpack.c.l.b16 %v53
    %v97 = vunpack.c.h.b16 %v53
    %v98 = vunpack.c.l.b16 %v54
    %v99 = vunpack.c.h.b16 %v54
    %v100 = vunpack.c.l.b16 %v55
    %v101 = vunpack.c.h.b16 %v55
    %v102 = vunpack.c.l.b16 %v56
    %v103 = vunpack.c.h.b16 %v56
    %v104 = vunpack.c.l.b16 %v57
    %v105 = vunpack.c.h.b16 %v57
    %v106 = vunpack.c.l.b16 %v58
    %v107 = vunpack.c.h.b16 %v58
    %v108 = vunpack.c.l.b16 %v59
    %v109 = vunpack.c.h.b16 %v59
    %v110 = vunpack.c.l.b16 %v60
    %v111 = vunpack.c.h.b16 %v60
    %v112 = vunpack.c.l.b16 %v61
    %v113 = vunpack.c.h.b16 %v61
    %v114 = vunpack.c.l.b16 %v62
    %v115 = vunpack.c.h.b16 %v62
    %v116 = vunpack.c.l.b16 %v63
    %v117 = vunpack.c.h.b16 %v63
    %v118 = vunpack.c.l.b16 %v64
    %v119 = vunpack.c.h.b16 %v64
    %v120 = vunpack.c.l.b16 %v65
    %v121 = vunpack.c.h.b16 %v65
    %v122 = vunpack.c.l.b16 %v66
    %v123 = vunpack.c.h.b16 %v66
    %v124 = vunpack.c.l.b16 %v67
    %v125 = vunpack.c.h.b16 %v67
    %v126 = vunpack.c.l.b16 %v68
    %v127 = vunpack.c.h.b16 %v68
    %v128 = vpack.c.b16 %v98, %v96
    %v129 = vpack.c.b16 %v99, %v97
    %v130 = vpack.c.b16 %v102, %v100
    %v131 = vpack.c.b16 %v103, %v101
    %v132 = vpack.c.b16 %v106, %v104
    %v133 = vpack.c.b16 %v107, %v105
    %v134 = vpack.c.b16 %v110, %v108
    %v135 = vpack.c.b16 %v111, %v109
    %v136 = vpack.c.b16 %v114, %v112
    %v137 = vpack.c.b16 %v115, %v113
    %v138 = vpack.c.b16 %v118, %v116
    %v139 = vpack.c.b16 %v119, %v117
    %v140 = vpack.c.b16 %v122, %v120
    %v141 = vpack.c.b16 %v123, %v121
    %v142 = vpack.c.b16 %v126, %v124
    %v143 = vpack.c.b16 %v127, %v125
    %160 = vmatprep.subr.bf16.mxu0 %v129
    %161 = vmatpush1.bf16.msra.mxu0 %v128
    %162 = vmatprep.subr.bf16.mxu0 %v131
    %163 = vmatpush1.bf16.msra.mxu0 %v130
    %164 = vmatprep.subr.bf16.mxu0 %v133
    %165 = vmatpush1.bf16.msra.mxu0 %v132
    %166 = vmatprep.subr.bf16.mxu0 %v135
    %167 = vmatpush1.bf16.msra.mxu0 %v134
    %168 = vmatprep.subr.bf16.mxu0 %v137
    %169 = vmatpush1.bf16.msra.mxu0 %v136
    %170 = vmatprep.subr.bf16.mxu0 %v139
    %171 = vmatpush1.bf16.msra.mxu0 %v138
    %172 = vmatprep.subr.bf16.mxu0 %v141
    %173 = vmatpush1.bf16.msra.mxu0 %v140
    %174 = vmatprep.subr.bf16.mxu0 %v143
    %175 = vmatpush1.bf16.msra.mxu0 %v142
    %176 = vmatprep.subr.bf16.mxu0 0
    %177 = vmatpush1.bf16.msra.mxu0 0
    %178 = vmatprep.subr.bf16.mxu0 0
    %179 = vmatpush1.bf16.msra.mxu0 0
    %180 = vmatprep.subr.bf16.mxu0 0
    %181 = vmatpush1.bf16.msra.mxu0 0
    %182 = vmatprep.subr.bf16.mxu0 0
    %183 = vmatpush1.bf16.msra.mxu0 0
    %184 = vmatprep.subr.bf16.mxu0 0
    %185 = vmatpush1.bf16.msra.mxu0 0
    %186 = vmatprep.subr.bf16.mxu0 0
    %187 = vmatpush1.bf16.msra.mxu0 0
    %188 = vmatprep.subr.bf16.mxu0 0
    %189 = vmatpush1.bf16.msra.mxu0 0
    %190 = vmatprep.subr.bf16.mxu0 0
    %191 = vmatpush1.bf16.msra.mxu0 0
    %192 = vmatprep.mubr.bf16.mxu0 0
    %193 = vmatmul.mubr.bf16.gmra.mrb[0].mxu0 %v51
    %v194 = vpop.f32.mrb[0].mxu0
    %v195 = vadd.f32 %v73, %v194
    %v196 = vpop.f32.mrb[0].mxu0
    %v197 = vadd.f32 %v77, %v196
    %v198 = vpop.f32.mrb[0].mxu0
    %v199 = vpop.f32.mrb[0].mxu0
    %200 = vdwg.mxu0
    %v201 = vxor.u32 %v195, 2147483648
    %v202 = vxor.u32 %v197, 2147483648
    %v203 = vmul.f32 %v201, 1.442695
    %v204 = vpow.pop %v203
    %v205 = vmul.f32 %v202, 1.442695
    %v206 = vpow.pop %v205
    %v207 = vadd.f32 %v204, 1.0
    %v208 = vadd.f32 %v206, 1.0
    %v209 = vrcp.pop %v207
    %v210 = vmul.f32 1.0, %v209
    %v211 = vrcp.pop %v208
    %v212 = vmul.f32 1.0, %v211
    %v213 = vmul.f32 %v195, %v210
    %v214 = vmul.f32 %v197, %v212
    %v215 = vld [vmem:[%s4 + $0x2] sm:$0x1]
    %v216 = vpack.c.bf16 %v213, %v213
    %v217 = vpack.c.bf16 %v214, %v214
    %v218 = vld [vmem:[#allocation5] sm:$0xf]
    %v219 = vld [vmem:[#allocation5 + $0x4] sm:$0xf]
    %v220 = vld [vmem:[#allocation5 + $0x8] sm:$0xf]
    %v221 = vld [vmem:[#allocation5 + $0xc] sm:$0xf]
    %v222 = vld [vmem:[#allocation5 + $0x10] sm:$0xf]
    %v223 = vld [vmem:[#allocation5 + $0x14] sm:$0xf]
    %v224 = vld [vmem:[#allocation5 + $0x18] sm:$0xf]
    %v225 = vld [vmem:[#allocation5 + $0x1c] sm:$0xf]
    %v226 = vld [vmem:[#allocation5 + $0x20] sm:$0xf]
    %v227 = vld [vmem:[#allocation5 + $0x24] sm:$0xf]
    %v228 = vld [vmem:[#allocation5 + $0x28] sm:$0xf]
    %v229 = vld [vmem:[#allocation5 + $0x2c] sm:$0xf]
    %v230 = vld [vmem:[#allocation5 + $0x30] sm:$0xf]
    %v231 = vld [vmem:[#allocation5 + $0x34] sm:$0xf]
    %v232 = vld [vmem:[#allocation5 + $0x38] sm:$0xf]
    %v233 = vld [vmem:[#allocation5 + $0x3c] sm:$0xf]
    %v234 = vld [vmem:[#allocation5 + $0x40] sm:$0xf]
    %v235 = vld [vmem:[#allocation5 + $0x44] sm:$0xf]
    %v236 = vld [vmem:[#allocation5 + $0x48] sm:$0xf]
    %v237 = vld [vmem:[#allocation5 + $0x4c] sm:$0xf]
    %v238 = vld [vmem:[#allocation5 + $0x50] sm:$0xf]
    %v239 = vld [vmem:[#allocation5 + $0x54] sm:$0xf]
    %v240 = vld [vmem:[#allocation5 + $0x58] sm:$0xf]
    %v241 = vld [vmem:[#allocation5 + $0x5c] sm:$0xf]
    %v242 = vld [vmem:[#allocation5 + $0x60] sm:$0xf]
    %v243 = vld [vmem:[#allocation5 + $0x64] sm:$0xf]
    %v244 = vld [vmem:[#allocation5 + $0x68] sm:$0xf]
    %v245 = vld [vmem:[#allocation5 + $0x6c] sm:$0xf]
    %v246 = vld [vmem:[#allocation5 + $0x70] sm:$0xf]
    %v247 = vld [vmem:[#allocation5 + $0x74] sm:$0xf]
    %v248 = vld [vmem:[#allocation5 + $0x78] sm:$0xf]
    %v249 = vld [vmem:[#allocation5 + $0x7c] sm:$0xf]
    %v251 = vlaneseq
    %v252 = vshrl.u32 %v251, 7
    %v253 = vsub.s32 0, %v252
    %v254 = vrot.slane %v215, %v253
    %v288 = vunpack.c.l.b16 %v218
    %v289 = vunpack.c.l.b16 %v219
    %v290 = vunpack.c.l.b16 %v220
    %v291 = vunpack.c.l.b16 %v221
    %v292 = vunpack.c.l.b16 %v222
    %v293 = vunpack.c.l.b16 %v223
    %v294 = vunpack.c.l.b16 %v224
    %v295 = vunpack.c.l.b16 %v225
    %v296 = vunpack.c.l.b16 %v226
    %v297 = vunpack.c.l.b16 %v227
    %v298 = vunpack.c.l.b16 %v228
    %v299 = vunpack.c.l.b16 %v229
    %v300 = vunpack.c.l.b16 %v230
    %v301 = vunpack.c.l.b16 %v231
    %v302 = vunpack.c.l.b16 %v232
    %v303 = vunpack.c.l.b16 %v233
    %v304 = vunpack.c.l.b16 %v234
    %v305 = vunpack.c.l.b16 %v235
    %v306 = vunpack.c.l.b16 %v236
    %v307 = vunpack.c.l.b16 %v237
    %v308 = vunpack.c.l.b16 %v238
    %v309 = vunpack.c.l.b16 %v239
    %v310 = vunpack.c.l.b16 %v240
    %v311 = vunpack.c.l.b16 %v241
    %v312 = vunpack.c.l.b16 %v242
    %v313 = vunpack.c.l.b16 %v243
    %v314 = vunpack.c.l.b16 %v244
    %v315 = vunpack.c.l.b16 %v245
    %v316 = vunpack.c.l.b16 %v246
    %v317 = vunpack.c.l.b16 %v247
    %v318 = vunpack.c.l.b16 %v248
    %v319 = vunpack.c.l.b16 %v249
    %v320 = vpack.c.b16 %v289, %v288
    %v321 = vpack.c.b16 %v291, %v290
    %v322 = vpack.c.b16 %v293, %v292
    %v323 = vpack.c.b16 %v295, %v294
    %v324 = vpack.c.b16 %v297, %v296
    %v325 = vpack.c.b16 %v299, %v298
    %v326 = vpack.c.b16 %v301, %v300
    %v327 = vpack.c.b16 %v303, %v302
    %v328 = vpack.c.b16 %v305, %v304
    %v329 = vpack.c.b16 %v307, %v306
    %v330 = vpack.c.b16 %v309, %v308
    %v331 = vpack.c.b16 %v311, %v310
    %v332 = vpack.c.b16 %v313, %v312
    %v333 = vpack.c.b16 %v315, %v314
    %v334 = vpack.c.b16 %v317, %v316
    %v335 = vpack.c.b16 %v319, %v318
    %352 = vmatprep.subr.bf16.mxu0 0
    %353 = vmatpush1.bf16.msra.mxu0 %v320
    %354 = vmatprep.subr.bf16.mxu0 0
    %355 = vmatpush1.bf16.msra.mxu0 %v321
    %356 = vmatprep.subr.bf16.mxu0 0
    %357 = vmatpush1.bf16.msra.mxu0 %v322
    %358 = vmatprep.subr.bf16.mxu0 0
    %359 = vmatpush1.bf16.msra.mxu0 %v323
    %360 = vmatprep.subr.bf16.mxu0 0
    %361 = vmatpush1.bf16.msra.mxu0 %v324
    %362 = vmatprep.subr.bf16.mxu0 0
    %363 = vmatpush1.bf16.msra.mxu0 %v325
    %364 = vmatprep.subr.bf16.mxu0 0
    %365 = vmatpush1.bf16.msra.mxu0 %v326
    %366 = vmatprep.subr.bf16.mxu0 0
    %367 = vmatpush1.bf16.msra.mxu0 %v327
    %368 = vmatprep.subr.bf16.mxu0 0
    %369 = vmatpush1.bf16.msra.mxu0 %v328
    %370 = vmatprep.subr.bf16.mxu0 0
    %371 = vmatpush1.bf16.msra.mxu0 %v329
    %372 = vmatprep.subr.bf16.mxu0 0
    %373 = vmatpush1.bf16.msra.mxu0 %v330
    %374 = vmatprep.subr.bf16.mxu0 0
    %375 = vmatpush1.bf16.msra.mxu0 %v331
    %376 = vmatprep.subr.bf16.mxu0 0
    %377 = vmatpush1.bf16.msra.mxu0 %v332
    %378 = vmatprep.subr.bf16.mxu0 0
    %379 = vmatpush1.bf16.msra.mxu0 %v333
    %380 = vmatprep.subr.bf16.mxu0 0
    %381 = vmatpush1.bf16.msra.mxu0 %v334
    %382 = vmatprep.subr.bf16.mxu0 0
    %383 = vmatpush1.bf16.msra.mxu0 %v335
    %384 = vmatprep.mubr.bf16.mxu0 %v217
    %385 = vmatmul.mubr.bf16.gmra.mrb[0].mxu0 %v216
    %v386 = vpop.f32.mrb[0].mxu0
    %v387 = vadd.f32 %v254, %v386
    %v388 = vpop.f32.mrb[0].mxu0
    %v389 = vpop.f32.mrb[0].mxu0
    %v390 = vpop.f32.mrb[0].mxu0
    %391 = vdwg.mxu0
    %v392 = vxor.u32 %v387, 2147483648
    %v393 = vmul.f32 %v392, 1.442695
    %v394 = vpow.pop %v393
    %v395 = vadd.f32 %v394, 1.0
    %v396 = vrcp.pop %v395
    %v397 = vmul.f32 1.0, %v396
    %v398 = vmul.f32 %v387, %v397
    %v399 = vld [vmem:[%s4 + $0x3] sm:$0x1]
    %v400 = vpack.c.bf16 %v398, %v398
    %v401 = vld [vmem:[%s3] sm:$0xf]
    %v402 = vld [vmem:[%s3 + $0x4] sm:$0xf]
    %v403 = vld [vmem:[%s3 + $0x8] sm:$0xf]
    %v404 = vld [vmem:[%s3 + $0xc] sm:$0xf]
    %v405 = vld [vmem:[%s3 + $0x10] sm:$0xf]
    %v406 = vld [vmem:[%s3 + $0x14] sm:$0xf]
    %v407 = vld [vmem:[%s3 + $0x18] sm:$0xf]
    %v408 = vld [vmem:[%s3 + $0x1c] sm:$0xf]
    %v409 = vld [vmem:[%s3 + $0x20] sm:$0xf]
    %v410 = vld [vmem:[%s3 + $0x24] sm:$0xf]
    %v411 = vld [vmem:[%s3 + $0x28] sm:$0xf]
    %v412 = vld [vmem:[%s3 + $0x2c] sm:$0xf]
    %v413 = vld [vmem:[%s3 + $0x30] sm:$0xf]
    %v414 = vld [vmem:[%s3 + $0x34] sm:$0xf]
    %v415 = vld [vmem:[%s3 + $0x38] sm:$0xf]
    %v416 = vld [vmem:[%s3 + $0x3c] sm:$0xf]
    %v418 = vlaneseq
    %v419 = vshrl.u32 %v418, 7
    %v420 = vsub.s32 0, %v419
    %v421 = vrot.slane %v399, %v420
    %v439 = vunpack.c.l.b16 %v401
    %v440 = vunpack.c.l.b16 %v402
    %v441 = vunpack.c.l.b16 %v403
    %v442 = vunpack.c.l.b16 %v404
    %v443 = vunpack.c.l.b16 %v405
    %v444 = vunpack.c.l.b16 %v406
    %v445 = vunpack.c.l.b16 %v407
    %v446 = vunpack.c.l.b16 %v408
    %v447 = vunpack.c.l.b16 %v409
    %v448 = vunpack.c.l.b16 %v410
    %v449 = vunpack.c.l.b16 %v411
    %v450 = vunpack.c.l.b16 %v412
    %v451 = vunpack.c.l.b16 %v413
    %v452 = vunpack.c.l.b16 %v414
    %v453 = vunpack.c.l.b16 %v415
    %v454 = vunpack.c.l.b16 %v416
    %v455 = vpack.c.b16 %v440, %v439
    %v456 = vpack.c.b16 %v442, %v441
    %v457 = vpack.c.b16 %v444, %v443
    %v458 = vpack.c.b16 %v446, %v445
    %v459 = vpack.c.b16 %v448, %v447
    %v460 = vpack.c.b16 %v450, %v449
    %v461 = vpack.c.b16 %v452, %v451
    %v462 = vpack.c.b16 %v454, %v453
    %471 = vmatprep.subr.bf16.mxu0 0
    %472 = vmatpush1.bf16.msra.mxu0 %v455
    %473 = vmatprep.subr.bf16.mxu0 0
    %474 = vmatpush1.bf16.msra.mxu0 %v456
    %475 = vmatprep.subr.bf16.mxu0 0
    %476 = vmatpush1.bf16.msra.mxu0 %v457
    %477 = vmatprep.subr.bf16.mxu0 0
    %478 = vmatpush1.bf16.msra.mxu0 %v458
    %479 = vmatprep.subr.bf16.mxu0 0
    %480 = vmatpush1.bf16.msra.mxu0 %v459
    %481 = vmatprep.subr.bf16.mxu0 0
    %482 = vmatpush1.bf16.msra.mxu0 %v460
    %483 = vmatprep.subr.bf16.mxu0 0
    %484 = vmatpush1.bf16.msra.mxu0 %v461
    %485 = vmatprep.subr.bf16.mxu0 0
    %486 = vmatpush1.bf16.msra.mxu0 %v462
    %487 = vmatprep.subr.bf16.mxu0 0
    %488 = vmatpush1.bf16.msra.mxu0 0
    %489 = vmatprep.subr.bf16.mxu0 0
    %490 = vmatpush1.bf16.msra.mxu0 0
    %491 = vmatprep.subr.bf16.mxu0 0
    %492 = vmatpush1.bf16.msra.mxu0 0
    %493 = vmatprep.subr.bf16.mxu0 0
    %494 = vmatpush1.bf16.msra.mxu0 0
    %495 = vmatprep.subr.bf16.mxu0 0
    %496 = vmatpush1.bf16.msra.mxu0 0
    %497 = vmatprep.subr.bf16.mxu0 0
    %498 = vmatpush1.bf16.msra.mxu0 0
    %499 = vmatprep.subr.bf16.mxu0 0
    %500 = vmatpush1.bf16.msra.mxu0 0
    %501 = vmatprep.subr.bf16.mxu0 0
    %502 = vmatpush1.bf16.msra.mxu0 0
    %503 = vmatprep.mubr.bf16.mxu0 0
    %504 = vmatmul.mubr.bf16.gmra.mrb[0].mxu0 %v400
    %v505 = vpop.f32.mrb[0].mxu0
    %v506 = vadd.f32 %v421, %v505
    %v507 = vpop.f32.mrb[0].mxu0
    %v508 = vpop.f32.mrb[0].mxu0
    %v509 = vpop.f32.mrb[0].mxu0
    %510 = vdwg.mxu0
    %v511 = vmul.f32 %v506, 0.1
    %v512 = vmul.f32 %v506, %v506
    %514 = vrot.lane.b32.xlu0 %v512, 125
    %v515 = vpop.permute.xlu0 %514
    %vm517 = vcmask 31744
    %v518 = vsel %vm517, %v515, 0.0
    %519 = vadd.xlane.f32.xlu0 %v518
    %v520 = vpop.xlane.xlu0 %519
    %v521 = vmax.f32 %v520, 1e-24
    %v522 = vrcp.pop %v521
    %v523 = vmul.f32 %v522, 2.0
    %524 = vrot.lane.b32.xlu0 %v512, 127
    %v525 = vpop.permute.xlu0 %524
    %v527 = vadd.f32 %v512, %v525
    %v528 = vmul.f32 %v523, %v527
    %v529 = vsub.f32 1.0, %v528
    %531 = vrot.lane.b32.xlu0 %v506, 127
    %v532 = vpop.permute.xlu0 %531
    %v534 = vmul.f32 %v506, %v532
    %535 = vrot.lane.b32.xlu0 %v506, 3
    %v536 = vpop.permute.xlu0 %535
    %v538 = vmul.f32 %v506, %v536
    %540 = vrot.lane.b32.xlu0 %v538, 126
    %v541 = vpop.permute.xlu0 %540
    %v543 = vsub.f32 %v534, %v541
    %v544 = vmul.f32 %v523, %v543
    %545 = vrot.lane.b32.xlu0 %v506, 126
    %v546 = vpop.permute.xlu0 %545
    %v548 = vmul.f32 %v506, %v546
    %549 = vrot.lane.b32.xlu0 %v506, 2
    %v550 = vpop.permute.xlu0 %549
    %v552 = vmul.f32 %v506, %v550
    %554 = vrot.lane.b32.xlu0 %v552, 127
    %v555 = vpop.permute.xlu0 %554
    %v557 = vadd.f32 %v548, %v555
    %v558 = vmul.f32 %v523, %v557
    %v559 = vadd.f32 %v534, %v541
    %v560 = vmul.f32 %v523, %v559
    %561 = vrot.lane.b32.xlu0 %v512, 126
    %v562 = vpop.permute.xlu0 %561
    %v564 = vadd.f32 %v512, %v562
    %v565 = vmul.f32 %v523, %v564
    %v566 = vsub.f32 1.0, %v565
    %567 = vrot.lane.b32.xlu0 %v506, 1
    %v568 = vpop.permute.xlu0 %567
    %v570 = vmul.f32 %v506, %v568
    %572 = vrot.lane.b32.xlu0 %v570, 1
    %v573 = vpop.permute.xlu0 %572
    %v575 = vsub.f32 %v534, %v573
    %v576 = vmul.f32 %v523, %v575
    %v577 = vsub.f32 %v548, %v555
    %v578 = vmul.f32 %v523, %v577
    %v579 = vadd.f32 %v534, %v573
    %v580 = vmul.f32 %v523, %v579
    %582 = vrot.lane.b32.xlu0 %v529, 123
    %v583 = vpop.permute.xlu0 %582
    %586 = vrot.lane.b32.xlu0 %v544, 125
    %v587 = vpop.permute.xlu0 %586
    %590 = vrot.lane.b32.xlu0 %v558, 126
    %v591 = vpop.permute.xlu0 %590
    %594 = vrot.lane.b32.xlu0 %v560, 127
    %v595 = vpop.permute.xlu0 %594
    %598 = vrot.lane.b32.xlu0 %v578, 2
    %v599 = vpop.permute.xlu0 %598
    %602 = vrot.lane.b32.xlu0 %v580, 2
    %v603 = vpop.permute.xlu0 %602
    %605 = vrot.lane.b32.xlu0 %v529, 4
    %v606 = vpop.permute.xlu0 %605
    %vm608 = vcmask 7168
    %v609 = vsel %vm608, %v583, %v587
    %vm610 = vcmask 15360
    %v611 = vsel %vm610, %v609, %v591
    %vm612 = vcmask 23552
    %v613 = vsel %vm612, %v611, %v595
    %v614 = vsel %vm517, %v613, %v566
    %vm615 = vcmask 39936
    %v616 = vsel %vm615, %v614, %v576
    %vm617 = vcmask 48128
    %v618 = vsel %vm617, %v616, %v599
    %vm619 = vcmask 56320
    %v620 = vsel %vm619, %v618, %v603
    %vm621 = vcmask 64512
    %v622 = vsel %vm621, %v620, %v606
    %624 = vrot.lane.b32.xlu0 %v511, 9
    %v625 = vpop.permute.xlu0 %624
    %vm627 = vcmask 72704
    %v628 = vsel %vm627, %v622, %v625
    %vm629 = vcmask 97280
    %630 = vst.msk [vmem:[#allocation7] sm:$0xff] %vm629, %v628
    // Predicated region
    $region30: #{banmo_rotation_decoder.1} parent=1 // pred_check
      _
    $region31: #{banmo_rotation_decoder.1} parent=1 // pred_check_branch
      %632 = sbr.rel (0) target = $region33
    $region32: #{banmo_rotation_decoder.1} parent=1 // pred_region
      %s634 = ssub.s32 128, 128
      %635 = vsyncadd [#allocation4], %s634
      %s637 = sshll.u32 [#allocation7], 4
      %s638 = int_to_ptr.vmem [resolvable:$true] %s637
      %640 = dma.vmem_to_hbm [thread:$0]  %s638, 128, %s5, [#allocation4]
    $region33: #{banmo_rotation_decoder.1} parent=1 // pred_fallthru
      _
    // Predicated region
    $region34: #{banmo_rotation_decoder.1} parent=1 // pred_check
      _
    $region35: #{banmo_rotation_decoder.1} parent=1 // pred_check_branch
      %642 = sbr.rel (0) target = $region37
    $region36: #{banmo_rotation_decoder.1} parent=1 // pred_region
      %643 = dma.done [#allocation4], 128
    $region37: #{banmo_rotation_decoder.1} parent=1 // pred_fallthru
      _
    %644 = vsyncpa [#allocation3], 1
    %645 = vsyncpa [#allocation6], 1
    %646 = vsyncpa [#allocation4], 1

</llo_original>
